<compile_context>
chip_gen: v7x
topology: tpu7x:2x2x1
jax: 0.10.0
libtpu: 0.0.40
codegen_flags: <defaults>
</compile_context>

<pallas_src>
import jax
import jax.numpy as jnp
from jax.experimental import pallas as pl
from jax.experimental.pallas import tpu as pltpu


def _round_up(x, m):
    return (x + m - 1) // m * m


def _gelu_tanh(x):
    # GELU with tanh approximation (matches nn.GELU(approximate="tanh") used by
    # Sana's CaptionEmbedder). tanh lowers to the EUP slot — free filler once
    # the MXU slot dominates.
    c = jnp.float32(0.7978845608028654)  # sqrt(2/pi)
    return 0.5 * x * (1.0 + jnp.tanh(c * (x + 0.044715 * x * x * x)))


def _y_embedder_kernel(x_ref, w1_ref, b1_ref, w2_ref, b2_ref, y_ref, h_ref):
    """One (row-tile, W2-column-tile) step of gelu_tanh(x @ W1 + b1) @ W2 + b2.

    The hidden activation for the current row tile is computed once (col == 0)
    into a bf16 VMEM scratch and reused for every W2 column tile.
    """
    @pl.when(pl.program_id(1) == 0)
    def _():
        h = jnp.dot(x_ref[...], w1_ref[...], preferred_element_type=jnp.float32)
        h_ref[...] = _gelu_tanh(h + b1_ref[...]).astype(h_ref.dtype)

    y = jnp.dot(h_ref[...], w2_ref[...], preferred_element_type=jnp.float32)
    y_ref[...] = (y + b2_ref[...]).astype(y_ref.dtype)


def _vmem_capacity_bytes():
    try:
        return int(pltpu.get_tpu_info().vmem_capacity_bytes)
    except Exception:
        return 64 << 20   # conservative fallback: v7x has the smallest VMEM/TC


_MAX_TILE_ROWS = 2048
_STEP_OVERHEAD_ROWS = 8   # ~0.35 us per grid step expressed in "rows of work"


def _choose_row_tile(rows, row_cap):
    """Pick a row tile (multiple of 128, <= row_cap) minimizing padded work."""
    cap = max(128, (min(_MAX_TILE_ROWS, int(row_cap)) // 128) * 128)
    best_t, best_cost = 128, None
    for t in range(128, cap + 1, 128):
        padded = _round_up(rows, t)
        cost = (padded - rows) + _STEP_OVERHEAD_ROWS * (padded // t)
        if best_cost is None or cost <= best_cost:      # ties -> larger tile
            best_t, best_cost = t, cost
    tile = best_t
    rows_pad = _round_up(rows, tile)
    # Prefer >=2 row tiles when it adds no padded rows (v7x has 2 TensorCores;
    # harmless single extra grid step on v5e/v6e).
    if rows_pad // tile == 1 and rows_pad >= 256:
        half = _round_up(rows_pad // 2, 8)
        if 0 < half < tile and _round_up(rows, half) == rows_pad:
            tile = half
    return tile, _round_up(rows, tile)


def _plan_tiling(rows, C, H, Ho, out_isz, vmem_cap):
    """Returns (tile_rows, rows_pad, tile_cols, n_col_tiles, o_pad, w2_resident)."""
    budget = int(0.85 * vmem_cap)
    w1_bytes = C * H * 2                                    # bf16, single-buffered
    bias_bytes = (_round_up(H, 128) + _round_up(Ho, 128)) * 4

    def per_row_bytes(tile_cols):
        # x double-buffered (bf16) + y double-buffered + h scratch (bf16)
        return 2 * C * 2 + 2 * tile_cols * out_isz + H * 2

    # Option A: full W2 resident in VMEM (single-buffered) — preferred.
    fixed_a = w1_bytes + H * Ho * 2 + bias_bytes
    row_cap_a = (budget - fixed_a) // per_row_bytes(Ho) if budget > fixed_a else 0
    if row_cap_a >= 128:
        tile_rows, rows_pad = _choose_row_tile(rows, row_cap_a)
        return tile_rows, rows_pad, Ho, 1, Ho, True

    # Option B (very large H on small-VMEM chips like v7x): stream W2 column
    # tiles (double-buffered) per row tile; h stays resident in scratch.
    # TODO(synk): if W1 alone overflows the budget, matmul-1 would also need a
    # K-tiled reduction axis; not needed for realistic Sana hidden sizes.
    o_pad = _round_up(Ho, 128)
    n128 = o_pad // 128
    tile_cols = 128
    for d in range(n128, 0, -1):
        if n128 % d:
            continue
        tc = 128 * d
        if tc > 1024:
            continue
        fixed_b = w1_bytes + 2 * H * tc * 2 + bias_bytes
        if budget > fixed_b and (budget - fixed_b) // per_row_bytes(tc) >= 256:
            tile_cols = tc
            break
    fixed_b = w1_bytes + 2 * H * tile_cols * 2 + bias_bytes
    row_cap_b = (budget - fixed_b) // per_row_bytes(tile_cols) if budget > fixed_b else 128
    tile_rows, rows_pad = _choose_row_tile(rows, max(row_cap_b, 128))
    return tile_rows, rows_pad, tile_cols, o_pad // tile_cols, o_pad, False


def caption_embedder_pallas(img_condition, w1, b1, w2, b2, *, out_dtype=jnp.bfloat16):
    """y_embedder forward (eval mode) as a fused Pallas MLP kernel.

    img_condition: (B, seq_len, C_cond)
    w1: (C_cond, H), b1: (H,), w2: (H, H_out), b2: (H_out,)
    returns: (B, seq_len, H_out) in `out_dtype` (bf16 default: halves writeback
    bytes and matches what the SanaMS backbone consumes).
    """
    B, S, C = img_condition.shape
    Cw, H = w1.shape
    Hw, Ho = w2.shape
    assert Cw == C and Hw == H

    rows = B * S
    out_isz = jnp.dtype(out_dtype).itemsize
    vmem_cap = _vmem_capacity_bytes()
    (tile_rows, rows_pad, tile_cols, n_col_tiles, o_pad,
     w2_resident) = _plan_tiling(rows, C, H, Ho, out_isz, vmem_cap)

    # Host-side one-time casts: bf16 matmul operands, f32 biases. Only the row
    # dim gets padded; lane dims stay unpadded (block dim == full array dim is
    # legal) unless W2 has to be column-tiled (very large H).
    x2d = img_condition.reshape(rows, C).astype(jnp.bfloat16)
    if rows_pad != rows:
        x2d = jnp.pad(x2d, ((0, rows_pad - rows), (0, 0)))
    w1p = w1.astype(jnp.bfloat16)
    b1p = b1.astype(jnp.float32).reshape(1, H)
    w2p = w2.astype(jnp.bfloat16)
    b2p = b2.astype(jnp.float32).reshape(1, Ho)
    if o_pad != Ho:
        w2p = jnp.pad(w2p, ((0, 0), (0, o_pad - Ho)))
        b2p = jnp.pad(b2p, ((0, 0), (0, o_pad - Ho)))

    grid = (rows_pad // tile_rows, n_col_tiles)
    resident = pl.Buffered(1)   # grid-invariant blocks: no double buffering

    def _w2_spec(shape, imap):
        if w2_resident:
            return pl.BlockSpec(shape, imap, pipeline_mode=resident)
        return pl.BlockSpec(shape, imap)   # streamed column tiles: default 2-deep

    # VMEM accounting: resident W1 (+W2 when it fits) + double-buffered x/y
    # tiles + bf16 h scratch, with headroom, capped at 0.9x physical capacity.
    fixed_bytes = (w1p.size * 2 + b1p.size * 4 + b2p.size * 4
                   + (1 if w2_resident else 2) * H * tile_cols * 2)
    per_row = 2 * C * 2 + 2 * tile_cols * out_isz + H * 2
    usage = fixed_bytes + tile_rows * per_row
    vmem_limit = min(int(0.9 * vmem_cap),
                     max(32 << 20, int(1.3 * usage) + (4 << 20)))

    cost = pl.CostEstimate(
        flops=2 * rows_pad * (C * H + H * o_pad),
        transcendentals=rows_pad * H,
        bytes_accessed=int(x2d.size * 2 + w1p.size * 2 + w2p.size * 2
                           + rows_pad * o_pad * out_isz),
    )

    out = pl.pallas_call(
        _y_embedder_kernel,
        out_shape=jax.ShapeDtypeStruct((rows_pad, o_pad), out_dtype),
        grid_spec=pltpu.PrefetchScalarGridSpec(
            num_scalar_prefetch=0,
            grid=grid,
            in_specs=[
                pl.BlockSpec((tile_rows, C), lambda i, j: (i, 0)),        # x rows
                pl.BlockSpec((C, H), lambda i, j: (0, 0),
                             pipeline_mode=resident),                     # W1
                pl.BlockSpec((1, H), lambda i, j: (0, 0),
                             pipeline_mode=resident),                     # b1
                _w2_spec((H, tile_cols), lambda i, j: (0, j)),            # W2
                _w2_spec((1, tile_cols), lambda i, j: (0, j)),            # b2
            ],
            out_specs=pl.BlockSpec((tile_rows, tile_cols), lambda i, j: (i, j)),
            scratch_shapes=[pltpu.VMEM((tile_rows, H), jnp.bfloat16)],    # h
        ),
        compiler_params=pltpu.CompilerParams(
            dimension_semantics=("parallel", "arbitrary"),
            vmem_limit_bytes=vmem_limit,
        ),
        cost_estimate=cost,
    )(x2d, w1p, b1p, w2p, b2p)

    if rows_pad != rows:
        out = out[:rows]            # leading-dim-only slice; fuses cheaply
    if o_pad != Ho:
        out = out[:, :Ho]           # only hit when W2 had to be column-tiled
    return out.reshape(B, S, Ho)


def img2img_wrapper_forward(x, img_condition, params):
    """Pallas equivalent of Img2ImgModelWrapper.forward (img_condition branch)."""
    y_processed = caption_embedder_pallas(
        img_condition, params["w1"], params["b1"], params["w2"], params["b2"]
    )
    B, seq_len, _ = y_processed.shape
    mask = jnp.ones((B, 1, 1, seq_len), dtype=jnp.bool_)
    # TODO(synk): the wrapped SanaMS backbone `self.model(x, y=y, mask=mask, ...)`
    # is an external model and is not part of this wrapper's own compute.
    return y_processed, mask


def _make_params(key, c_cond, hidden, dtype=jnp.float32):
    k1, k2 = jax.random.split(key)
    w1 = (jax.random.normal(k1, (c_cond, hidden), jnp.float32) / jnp.sqrt(c_cond)).astype(dtype)
    w2 = (jax.random.normal(k2, (hidden, hidden), jnp.float32) / jnp.sqrt(hidden)).astype(dtype)
    b1 = jnp.zeros((hidden,), dtype)
    b2 = jnp.zeros((hidden,), dtype)
    return {"w1": w1, "b1": b1, "w2": w2, "b2": b2}


def _reference(img_condition, params):
    # Emulates the kernel's bf16-operand / f32-accumulate arithmetic.
    x = img_condition.astype(jnp.bfloat16).astype(jnp.float32)
    w1 = params["w1"].astype(jnp.bfloat16).astype(jnp.float32)
    w2 = params["w2"].astype(jnp.bfloat16).astype(jnp.float32)
    h = x @ w1 + params["b1"].astype(jnp.float32)
    h = _gelu_tanh(h).astype(jnp.bfloat16).astype(jnp.float32)
    y = h @ w2 + params["b2"].astype(jnp.float32)
    return y


if __name__ == "__main__":
    key = jax.random.PRNGKey(0)
    k_x, k_cond, k_p = jax.random.split(key, 3)

    B, Cx, Hx, Wx = 2, 4, 16, 16         # latent x (NCHW), forwarded to backbone
    seq_len, c_cond, hidden = 8, 32, 32  # img_condition tokens

    x = jax.random.normal(k_x, (B, Cx, Hx, Wx), jnp.float32)
    img_condition = jax.random.normal(k_cond, (B, seq_len, c_cond), jnp.float32)
    params = _make_params(k_p, c_cond, hidden)

    y, mask = img2img_wrapper_forward(x, img_condition, params)
    y = jax.block_until_ready(y)
    mask = jax.block_until_ready(mask)

    # sanity check against plain-JAX reference (bf16-matched arithmetic)
    y_ref = _reference(img_condition, params)
    assert y.shape == (B, seq_len, hidden)
    assert y.dtype == jnp.bfloat16
    assert mask.shape == (B, 1, 1, seq_len) and mask.dtype == jnp.bool_
    assert bool(jnp.all(mask))
    diff = jnp.max(jnp.abs(y.astype(jnp.float32) - y_ref))
    assert jnp.allclose(y.astype(jnp.float32), y_ref, atol=3e-2, rtol=3e-2), float(diff)

    print("KERNEL_OK")
</pallas_src>

<mosaic_0001>
module attributes {stable_mosaic.version = 11 : i64} {
  func.func @_y_embedder_kernel(%arg0: i32, %arg1: i32, %arg2: memref<128x32xbf16, #tpu.memory_space<vmem>>, %arg3: memref<32x32xbf16, #tpu.memory_space<vmem>>, %arg4: memref<1x32xf32, #tpu.memory_space<vmem>>, %arg5: memref<32x32xbf16, #tpu.memory_space<vmem>>, %arg6: memref<1x32xf32, #tpu.memory_space<vmem>>, %arg7: memref<128x32xbf16, #tpu.memory_space<vmem>>, %arg8: memref<128x32xbf16, #tpu.memory_space<vmem>>) attributes {dimension_semantics = [#tpu.dimension_semantics<parallel>, #tpu.dimension_semantics<arbitrary>], iteration_bounds = array<i64: 1, 1>, scalar_prefetch = 0 : i64, scratch_operands = 1 : i64, tpu.core_type = #tpu.core_type<tc>, window_params = [{transform_indices = @transform_0, window_bounds = array<i64: 128, 32>}, {pipeline_mode = #tpu.pipeline_mode<synchronous>, transform_indices = @transform_1, window_bounds = array<i64: 32, 32>}, {pipeline_mode = #tpu.pipeline_mode<synchronous>, transform_indices = @transform_2, window_bounds = array<i64: 1, 32>}, {pipeline_mode = #tpu.pipeline_mode<synchronous>, transform_indices = @transform_3, window_bounds = array<i64: 32, 32>}, {pipeline_mode = #tpu.pipeline_mode<synchronous>, transform_indices = @transform_4, window_bounds = array<i64: 1, 32>}, {transform_indices = @transform_5, window_bounds = array<i64: 128, 32>}]} {
    %c0_i32 = arith.constant 0 : i32
    %0 = arith.cmpi eq, %arg1, %c0_i32 : i32
    %1 = arith.extui %0 : i1 to i32
    %c0_i32_0 = arith.constant 0 : i32
    %2 = arith.cmpi ne, %1, %c0_i32_0 : i32
    scf.if %2 {
      %c0_8 = arith.constant 0 : index
      %c0_9 = arith.constant 0 : index
      %11 = vector.load %arg2[%c0_8, %c0_9] : memref<128x32xbf16, #tpu.memory_space<vmem>>, vector<128x32xbf16>
      %c0_10 = arith.constant 0 : index
      %c0_11 = arith.constant 0 : index
      %12 = vector.load %arg3[%c0_10, %c0_11] : memref<32x32xbf16, #tpu.memory_space<vmem>>, vector<32x32xbf16>
      %cst_12 = arith.constant dense<0.000000e+00> : vector<128x32xf32>
      %13 = tpu.matmul %11, %12, %cst_12 {dimension_numbers = #tpu.dot_dimension_numbers<[1], [0], [0], [1], [0, 0, 1, 1], [], []>} : vector<128x32xbf16>, vector<32x32xbf16>, vector<128x32xf32> -> vector<128x32xf32>
      %c0_13 = arith.constant 0 : index
      %c0_14 = arith.constant 0 : index
      %14 = vector.load %arg4[%c0_13, %c0_14] : memref<1x32xf32, #tpu.memory_space<vmem>>, vector<1x32xf32>
      %15 = vector.broadcast %14 : vector<1x32xf32> to vector<128x32xf32>
      %16 = arith.addf %13, %15 : vector<128x32xf32>
      %cst_15 = arith.constant 5.000000e-01 : f32
      %17 = vector.broadcast %cst_15 : f32 to vector<128x32xf32>
      %18 = arith.mulf %17, %16 : vector<128x32xf32>
      %cst_16 = arith.constant 4.471500e-02 : f32
      %19 = vector.broadcast %cst_16 : f32 to vector<128x32xf32>
      %20 = arith.mulf %19, %16 : vector<128x32xf32>
      %21 = arith.mulf %20, %16 : vector<128x32xf32>
      %22 = arith.mulf %21, %16 : vector<128x32xf32>
      %23 = arith.addf %16, %22 : vector<128x32xf32>
      %cst_17 = arith.constant 0.797884583 : f32
      %24 = vector.broadcast %cst_17 : f32 to vector<128x32xf32>
      %25 = arith.mulf %24, %23 : vector<128x32xf32>
      %26 = math.tanh %25 : vector<128x32xf32>
      %cst_18 = arith.constant 1.000000e+00 : f32
      %27 = vector.broadcast %cst_18 : f32 to vector<128x32xf32>
      %28 = arith.addf %27, %26 : vector<128x32xf32>
      %29 = arith.mulf %18, %28 : vector<128x32xf32>
      %30 = arith.truncf %29 : vector<128x32xf32> to vector<128x32xbf16>
      %c0_19 = arith.constant 0 : index
      %c0_20 = arith.constant 0 : index
      %31 = vector.load %arg8[%c0_19, %c0_20] : memref<128x32xbf16, #tpu.memory_space<vmem>>, vector<128x32xbf16>
      tpu.vector_store %arg8[%c0_19, %c0_20], %30 {strides = array<i32>} : memref<128x32xbf16, #tpu.memory_space<vmem>>, vector<128x32xbf16>,
    } else {
    }
    %c0 = arith.constant 0 : index
    %c0_1 = arith.constant 0 : index
    %3 = vector.load %arg8[%c0, %c0_1] : memref<128x32xbf16, #tpu.memory_space<vmem>>, vector<128x32xbf16>
    %c0_2 = arith.constant 0 : index
    %c0_3 = arith.constant 0 : index
    %4 = vector.load %arg5[%c0_2, %c0_3] : memref<32x32xbf16, #tpu.memory_space<vmem>>, vector<32x32xbf16>
    %cst = arith.constant dense<0.000000e+00> : vector<128x32xf32>
    %5 = tpu.matmul %3, %4, %cst {dimension_numbers = #tpu.dot_dimension_numbers<[1], [0], [0], [1], [0, 0, 1, 1], [], []>} : vector<128x32xbf16>, vector<32x32xbf16>, vector<128x32xf32> -> vector<128x32xf32>
    %c0_4 = arith.constant 0 : index
    %c0_5 = arith.constant 0 : index
    %6 = vector.load %arg6[%c0_4, %c0_5] : memref<1x32xf32, #tpu.memory_space<vmem>>, vector<1x32xf32>
    %7 = vector.broadcast %6 : vector<1x32xf32> to vector<128x32xf32>
    %8 = arith.addf %5, %7 : vector<128x32xf32>
    %9 = arith.truncf %8 : vector<128x32xf32> to vector<128x32xbf16>
    %c0_6 = arith.constant 0 : index
    %c0_7 = arith.constant 0 : index
    %10 = vector.load %arg7[%c0_6, %c0_7] : memref<128x32xbf16, #tpu.memory_space<vmem>>, vector<128x32xbf16>
    tpu.vector_store %arg7[%c0_6, %c0_7], %9 {strides = array<i32>} : memref<128x32xbf16, #tpu.memory_space<vmem>>, vector<128x32xbf16>,
    return
  }
  func.func @transform_0(%arg0: i32, %arg1: i32) -> (i32, i32) {
    %c0_i32 = arith.constant 0 : i32
    %c0_i32_0 = arith.constant 0 : i32
    return %arg0, %c0_i32 : i32, i32
  }
  func.func @transform_1(%arg0: i32, %arg1: i32) -> (i32, i32) {
    %c0_i32 = arith.constant 0 : i32
    %c0_i32_0 = arith.constant 0 : i32
    %c0_i32_1 = arith.constant 0 : i32
    return %c0_i32, %c0_i32_0 : i32, i32
  }
  func.func @transform_2(%arg0: i32, %arg1: i32) -> (i32, i32) {
    %c0_i32 = arith.constant 0 : i32
    %c0_i32_0 = arith.constant 0 : i32
    %c0_i32_1 = arith.constant 0 : i32
    return %c0_i32, %c0_i32_0 : i32, i32
  }
  func.func @transform_3(%arg0: i32, %arg1: i32) -> (i32, i32) {
    %c0_i32 = arith.constant 0 : i32
    %c0_i32_0 = arith.constant 0 : i32
    return %c0_i32, %arg1 : i32, i32
  }
  func.func @transform_4(%arg0: i32, %arg1: i32) -> (i32, i32) {
    %c0_i32 = arith.constant 0 : i32
    %c0_i32_0 = arith.constant 0 : i32
    return %c0_i32, %arg1 : i32, i32
  }
  func.func @transform_5(%arg0: i32, %arg1: i32) -> (i32, i32) {
    %c0_i32 = arith.constant 0 : i32
    return %arg0, %arg1 : i32, i32
  }
}

</mosaic_0001>

<llo_original>
// kernel: tpu_custom_call.1
$region0: #{tpu_custom_call.1}
  #allocation0 [shape = 'u32[]', space=smem, size = 0x4, offset = 0x4, fixed_abs, tag = 'smem constant byte address 0x4 - core index']
  #allocation1 [shape = 'u32[144,128]{1,0:T(1,128)}', space=vmem, size = 0x12000, scoped, tag = 'internal scratch']
  #allocation2 [shape = 'bf16[128,32]{1,0:T(16,128)(2,1)}', space=vmem, size = 0x8000, scoped, tag = 'scratch operand']
  %s0 = inlined_call_operand.vmem [shape: bf16[128,32], index: 0, kind: input, shape index: {}]
  %s1 = inlined_call_operand.vmem [shape: bf16[32,32], index: 1, kind: input, shape index: {}]
  %s2 = inlined_call_operand.vmem [shape: f32[1,32], index: 2, kind: input, shape index: {}]
  %s3 = inlined_call_operand.vmem [shape: bf16[32,32], index: 3, kind: input, shape index: {}]
  %s4 = inlined_call_operand.vmem [shape: f32[1,32], index: 4, kind: input, shape index: {}]
  %s5 = inlined_call_operand.vmem [shape: bf16[128,32], index: 5, kind: output, shape index: {}]
  %s6 = sld [smem:[#allocation0]]
  $region34: #{tpu_custom_call.1} parent=0
    _
  %s8 = ssub.s32 1, %s6
  %s9 = scalar_select 0, %s8, %s6
  // Predicated region
  $region2: #{tpu_custom_call.1} parent=0 // pred_check
    _
  $region3: #{tpu_custom_call.1} parent=0 // pred_check_branch
    %11 = sbr.rel (0) target = $region5
  $region4: #{tpu_custom_call.1} parent=0 // pred_region
    _
  $region5: #{tpu_custom_call.1} parent=0 // pred_fallthru
    _
  // Predicated region
  $region6: #{tpu_custom_call.1} parent=0 // pred_check
    _
  $region7: #{tpu_custom_call.1} parent=0 // pred_check_branch
    %13 = sbr.rel (0) target = $region9
  $region8: #{tpu_custom_call.1} parent=0 // pred_region
    _
  $region9: #{tpu_custom_call.1} parent=0 // pred_fallthru
    _
  // Predicated region
  $region10: #{tpu_custom_call.1} parent=0 // pred_check
    _
  $region11: #{tpu_custom_call.1} parent=0 // pred_check_branch
    %15 = sbr.rel (0) target = $region13
  $region12: #{tpu_custom_call.1} parent=0 // pred_region
    _
  $region13: #{tpu_custom_call.1} parent=0 // pred_fallthru
    _
  // Predicated region
  $region14: #{tpu_custom_call.1} parent=0 // pred_check
    _
  $region15: #{tpu_custom_call.1} parent=0 // pred_check_branch
    %17 = sbr.rel (0) target = $region17
  $region16: #{tpu_custom_call.1} parent=0 // pred_region
    _
  $region17: #{tpu_custom_call.1} parent=0 // pred_fallthru
    _
  // Predicated region
  $region18: #{tpu_custom_call.1} parent=0 // pred_check
    _
  $region19: #{tpu_custom_call.1} parent=0 // pred_check_branch
    %19 = sbr.rel (0) target = $region21
  $region20: #{tpu_custom_call.1} parent=0 // pred_region
    _
  $region21: #{tpu_custom_call.1} parent=0 // pred_fallthru
    _
  %p21 = scmp.eq.s32.totalorder 0, 0
  // Predicated region
  $region22: #{tpu_custom_call.1} parent=0 // pred_check
    %p22 = pneg %p21
  $region23: #{tpu_custom_call.1} parent=0 // pred_check_branch
    %24 = sbr.rel (%p22) target = $region25
  $region24: #{tpu_custom_call.1} parent=0 // pred_region
    %v25 = vld [vmem:[%s0] sm:$0xf]
    %v26 = vld [vmem:[%s0 + $0x4] sm:$0xf]
    %v27 = vld [vmem:[%s0 + $0x8] sm:$0xf]
    %v28 = vld [vmem:[%s0 + $0xc] sm:$0xf]
    %v29 = vld [vmem:[%s0 + $0x10] sm:$0xf]
    %v30 = vld [vmem:[%s0 + $0x14] sm:$0xf]
    %v31 = vld [vmem:[%s0 + $0x18] sm:$0xf]
    %v32 = vld [vmem:[%s0 + $0x1c] sm:$0xf]
    %v33 = vld [vmem:[%s0 + $0x20] sm:$0xf]
    %v34 = vld [vmem:[%s0 + $0x24] sm:$0xf]
    %v35 = vld [vmem:[%s0 + $0x28] sm:$0xf]
    %v36 = vld [vmem:[%s0 + $0x2c] sm:$0xf]
    %v37 = vld [vmem:[%s0 + $0x30] sm:$0xf]
    %v38 = vld [vmem:[%s0 + $0x34] sm:$0xf]
    %v39 = vld [vmem:[%s0 + $0x38] sm:$0xf]
    %v40 = vld [vmem:[%s0 + $0x3c] sm:$0xf]
    %v41 = vld [vmem:[%s1] sm:$0xf]
    %v42 = vld [vmem:[%s1 + $0x4] sm:$0xf]
    %v43 = vld [vmem:[%s1 + $0x8] sm:$0xf]
    %v44 = vld [vmem:[%s1 + $0xc] sm:$0xf]
    %v45 = vld [vmem:[%s2] sm:$0x1]
    %v47 = vlaneseq
    %v48 = vshrl.u32 %v47, 7
    %v49 = vsub.s32 0, %v48
    %v50 = vrot.slane %v45, %v49
    %v68 = vunpack.c.l.b16 %v25
    %v69 = vunpack.c.l.b16 %v26
    %v70 = vunpack.c.l.b16 %v27
    %v71 = vunpack.c.l.b16 %v28
    %v72 = vunpack.c.l.b16 %v29
    %v73 = vunpack.c.l.b16 %v30
    %v74 = vunpack.c.l.b16 %v31
    %v75 = vunpack.c.l.b16 %v32
    %v76 = vunpack.c.l.b16 %v33
    %v77 = vunpack.c.l.b16 %v34
    %v78 = vunpack.c.l.b16 %v35
    %v79 = vunpack.c.l.b16 %v36
    %v80 = vunpack.c.l.b16 %v37
    %v81 = vunpack.c.l.b16 %v38
    %v82 = vunpack.c.l.b16 %v39
    %v83 = vunpack.c.l.b16 %v40
    %v84 = vpack.c.b16 %v69, %v68
    %v85 = vpack.c.b16 %v71, %v70
    %v86 = vpack.c.b16 %v73, %v72
    %v87 = vpack.c.b16 %v75, %v74
    %v88 = vpack.c.b16 %v77, %v76
    %v89 = vpack.c.b16 %v79, %v78
    %v90 = vpack.c.b16 %v81, %v80
    %v91 = vpack.c.b16 %v83, %v82
    %v96 = vunpack.c.l.b16 %v41
    %v97 = vunpack.c.l.b16 %v42
    %v98 = vunpack.c.l.b16 %v43
    %v99 = vunpack.c.l.b16 %v44
    %v100 = vpack.c.b16 %v97, %v96
    %v101 = vpack.c.b16 %v99, %v98
    %vm104 = vcmask 261120
    %v106 = vsel %vm104, %v84, 0
    %v109 = vsel %vm104, %v85, 0
    %v112 = vsel %vm104, %v86, 0
    %v115 = vsel %vm104, %v87, 0
    %v118 = vsel %vm104, %v88, 0
    %v121 = vsel %vm104, %v89, 0
    %v124 = vsel %vm104, %v90, 0
    %v127 = vsel %vm104, %v91, 0
    %129 = vmatprep.subr.bf16.mxu0 0
    %130 = vmatpush1.bf16.msra.mxu0 %v100
    %131 = vmatprep.subr.bf16.mxu0 0
    %132 = vmatpush1.bf16.msra.mxu0 %v101
    %133 = vmatprep.subr.bf16.mxu0 0
    %134 = vmatpush1.bf16.msra.mxu0 0
    %135 = vmatprep.subr.bf16.mxu0 0
    %136 = vmatpush1.bf16.msra.mxu0 0
    %137 = vmatprep.subr.bf16.mxu0 0
    %138 = vmatpush1.bf16.msra.mxu0 0
    %139 = vmatprep.subr.bf16.mxu0 0
    %140 = vmatpush1.bf16.msra.mxu0 0
    %141 = vmatprep.subr.bf16.mxu0 0
    %142 = vmatpush1.bf16.msra.mxu0 0
    %143 = vmatprep.subr.bf16.mxu0 0
    %144 = vmatpush1.bf16.msra.mxu0 0
    %145 = vmatprep.subr.bf16.mxu0 0
    %146 = vmatpush1.bf16.msra.mxu0 0
    %147 = vmatprep.subr.bf16.mxu0 0
    %148 = vmatpush1.bf16.msra.mxu0 0
    %149 = vmatprep.subr.bf16.mxu0 0
    %150 = vmatpush1.bf16.msra.mxu0 0
    %151 = vmatprep.subr.bf16.mxu0 0
    %152 = vmatpush1.bf16.msra.mxu0 0
    %153 = vmatprep.subr.bf16.mxu0 0
    %154 = vmatpush1.bf16.msra.mxu0 0
    %155 = vmatprep.subr.bf16.mxu0 0
    %156 = vmatpush1.bf16.msra.mxu0 0
    %157 = vmatprep.subr.bf16.mxu0 0
    %158 = vmatpush1.bf16.msra.mxu0 0
    %159 = vmatprep.subr.bf16.mxu0 0
    %160 = vmatpush1.bf16.msra.mxu0 0
    %161 = vmatprep.mubr.bf16.mxu0 0
    %162 = vmatmul.mubr.bf16.gmra.mrb[0].mxu0 %v106
    %v163 = vpop.f32.mrb[0].mxu0
    %v164 = vadd.f32 %v50, %v163
    %v165 = vpop.f32.mrb[0].mxu0
    %v166 = vpop.f32.mrb[0].mxu0
    %v167 = vadd.f32 %v50, %v166
    %v168 = vpop.f32.mrb[0].mxu0
    %169 = vmatprep.mubr.bf16.mxu0 0
    %170 = vmatmul.mubr.bf16.gmra.mrb[0].mxu0 %v109
    %v171 = vpop.f32.mrb[0].mxu0
    %v172 = vadd.f32 %v50, %v171
    %v173 = vpop.f32.mrb[0].mxu0
    %v174 = vpop.f32.mrb[0].mxu0
    %v175 = vadd.f32 %v50, %v174
    %v176 = vpop.f32.mrb[0].mxu0
    %177 = vmatprep.mubr.bf16.mxu0 0
    %178 = vmatmul.mubr.bf16.gmra.mrb[0].mxu0 %v112
    %v179 = vpop.f32.mrb[0].mxu0
    %v180 = vadd.f32 %v50, %v179
    %v181 = vpop.f32.mrb[0].mxu0
    %v182 = vpop.f32.mrb[0].mxu0
    %v183 = vadd.f32 %v50, %v182
    %v184 = vpop.f32.mrb[0].mxu0
    %185 = vmatprep.mubr.bf16.mxu0 0
    %186 = vmatmul.mubr.bf16.gmra.mrb[0].mxu0 %v115
    %v187 = vpop.f32.mrb[0].mxu0
    %v188 = vadd.f32 %v50, %v187
    %v189 = vpop.f32.mrb[0].mxu0
    %v190 = vpop.f32.mrb[0].mxu0
    %v191 = vadd.f32 %v50, %v190
    %v192 = vpop.f32.mrb[0].mxu0
    %193 = vmatprep.mubr.bf16.mxu0 0
    %194 = vmatmul.mubr.bf16.gmra.mrb[0].mxu0 %v118
    %v195 = vpop.f32.mrb[0].mxu0
    %v196 = vadd.f32 %v50, %v195
    %v197 = vpop.f32.mrb[0].mxu0
    %v198 = vpop.f32.mrb[0].mxu0
    %v199 = vadd.f32 %v50, %v198
    %v200 = vpop.f32.mrb[0].mxu0
    %201 = vmatprep.mubr.bf16.mxu0 0
    %202 = vmatmul.mubr.bf16.gmra.mrb[0].mxu0 %v121
    %v203 = vpop.f32.mrb[0].mxu0
    %v204 = vadd.f32 %v50, %v203
    %v205 = vpop.f32.mrb[0].mxu0
    %v206 = vpop.f32.mrb[0].mxu0
    %v207 = vadd.f32 %v50, %v206
    %v208 = vpop.f32.mrb[0].mxu0
    %209 = vmatprep.mubr.bf16.mxu0 0
    %210 = vmatmul.mubr.bf16.gmra.mrb[0].mxu0 %v124
    %v211 = vpop.f32.mrb[0].mxu0
    %v212 = vadd.f32 %v50, %v211
    %v213 = vpop.f32.mrb[0].mxu0
    %v214 = vpop.f32.mrb[0].mxu0
    %v215 = vadd.f32 %v50, %v214
    %v216 = vpop.f32.mrb[0].mxu0
    %217 = vmatprep.mubr.bf16.mxu0 0
    %218 = vmatmul.mubr.bf16.gmra.mrb[0].mxu0 %v127
    %v219 = vpop.f32.mrb[0].mxu0
    %v220 = vadd.f32 %v50, %v219
    %v221 = vpop.f32.mrb[0].mxu0
    %v222 = vpop.f32.mrb[0].mxu0
    %v223 = vadd.f32 %v50, %v222
    %v224 = vpop.f32.mrb[0].mxu0
    %225 = vdwg.mxu0
    %v226 = vmul.f32 %v164, 0.5
    %v227 = vmul.f32 %v167, 0.5
    %v228 = vmul.f32 %v172, 0.5
    %v229 = vmul.f32 %v175, 0.5
    %v230 = vmul.f32 %v180, 0.5
    %v231 = vmul.f32 %v183, 0.5
    %v232 = vmul.f32 %v188, 0.5
    %v233 = vmul.f32 %v191, 0.5
    %v234 = vmul.f32 %v196, 0.5
    %v235 = vmul.f32 %v199, 0.5
    %v236 = vmul.f32 %v204, 0.5
    %v237 = vmul.f32 %v207, 0.5
    %v238 = vmul.f32 %v212, 0.5
    %v239 = vmul.f32 %v215, 0.5
    %v240 = vmul.f32 %v220, 0.5
    %v241 = vmul.f32 %v223, 0.5
    %v242 = vmul.f32 %v164, 0.044715
    %v243 = vmul.f32 %v167, 0.044715
    %v244 = vmul.f32 %v172, 0.044715
    %v245 = vmul.f32 %v175, 0.044715
    %v246 = vmul.f32 %v180, 0.044715
    %v247 = vmul.f32 %v183, 0.044715
    %v248 = vmul.f32 %v188, 0.044715
    %v249 = vmul.f32 %v191, 0.044715
    %v250 = vmul.f32 %v196, 0.044715
    %v251 = vmul.f32 %v199, 0.044715
    %v252 = vmul.f32 %v204, 0.044715
    %v253 = vmul.f32 %v207, 0.044715
    %v254 = vmul.f32 %v212, 0.044715
    %v255 = vmul.f32 %v215, 0.044715
    %v256 = vmul.f32 %v220, 0.044715
    %v257 = vmul.f32 %v223, 0.044715
    %v258 = vmul.f32 %v242, %v164
    %v259 = vmul.f32 %v243, %v167
    %v260 = vmul.f32 %v244, %v172
    %v261 = vmul.f32 %v245, %v175
    %v262 = vmul.f32 %v246, %v180
    %v263 = vmul.f32 %v247, %v183
    %v264 = vmul.f32 %v248, %v188
    %v265 = vmul.f32 %v249, %v191
    %v266 = vmul.f32 %v250, %v196
    %v267 = vmul.f32 %v251, %v199
    %v268 = vmul.f32 %v252, %v204
    %v269 = vmul.f32 %v253, %v207
    %v270 = vmul.f32 %v254, %v212
    %v271 = vmul.f32 %v255, %v215
    %v272 = vmul.f32 %v256, %v220
    %v273 = vmul.f32 %v257, %v223
    %v274 = vmul.f32 %v258, %v164
    %v275 = vmul.f32 %v259, %v167
    %v276 = vmul.f32 %v260, %v172
    %v277 = vmul.f32 %v261, %v175
    %v278 = vmul.f32 %v262, %v180
    %v279 = vmul.f32 %v263, %v183
    %v280 = vmul.f32 %v264, %v188
    %v281 = vmul.f32 %v265, %v191
    %v282 = vmul.f32 %v266, %v196
    %v283 = vmul.f32 %v267, %v199
    %v284 = vmul.f32 %v268, %v204
    %v285 = vmul.f32 %v269, %v207
    %v286 = vmul.f32 %v270, %v212
    %v287 = vmul.f32 %v271, %v215
    %v288 = vmul.f32 %v272, %v220
    %v289 = vmul.f32 %v273, %v223
    %v290 = vadd.f32 %v164, %v274
    %v291 = vadd.f32 %v167, %v275
    %v292 = vadd.f32 %v172, %v276
    %v293 = vadd.f32 %v175, %v277
    %v294 = vadd.f32 %v180, %v278
    %v295 = vadd.f32 %v183, %v279
    %v296 = vadd.f32 %v188, %v280
    %v297 = vadd.f32 %v191, %v281
    %v298 = vadd.f32 %v196, %v282
    %v299 = vadd.f32 %v199, %v283
    %v300 = vadd.f32 %v204, %v284
    %v301 = vadd.f32 %v207, %v285
    %v302 = vadd.f32 %v212, %v286
    %v303 = vadd.f32 %v215, %v287
    %v304 = vadd.f32 %v220, %v288
    %v305 = vadd.f32 %v223, %v289
    %v306 = vmul.f32 %v290, 0.7978846
    %v307 = vmul.f32 %v291, 0.7978846
    %v308 = vmul.f32 %v292, 0.7978846
    %v309 = vmul.f32 %v293, 0.7978846
    %v310 = vmul.f32 %v294, 0.7978846
    %v311 = vmul.f32 %v295, 0.7978846
    %v312 = vmul.f32 %v296, 0.7978846
    %v313 = vmul.f32 %v297, 0.7978846
    %v314 = vmul.f32 %v298, 0.7978846
    %v315 = vmul.f32 %v299, 0.7978846
    %v316 = vmul.f32 %v300, 0.7978846
    %v317 = vmul.f32 %v301, 0.7978846
    %v318 = vmul.f32 %v302, 0.7978846
    %v319 = vmul.f32 %v303, 0.7978846
    %v320 = vmul.f32 %v304, 0.7978846
    %v321 = vmul.f32 %v305, 0.7978846
    %v322 = vtanh.pop %v306
    %v323 = vtanh.pop %v307
    %v324 = vtanh.pop %v308
    %v325 = vtanh.pop %v309
    %v326 = vtanh.pop %v310
    %v327 = vtanh.pop %v311
    %v328 = vtanh.pop %v312
    %v329 = vtanh.pop %v313
    %v330 = vtanh.pop %v314
    %v331 = vtanh.pop %v315
    %v332 = vtanh.pop %v316
    %v333 = vtanh.pop %v317
    %v334 = vtanh.pop %v318
    %v335 = vtanh.pop %v319
    %v336 = vtanh.pop %v320
    %v337 = vtanh.pop %v321
    %v338 = vadd.f32 %v322, 1.0
    %v339 = vadd.f32 %v323, 1.0
    %v340 = vadd.f32 %v324, 1.0
    %v341 = vadd.f32 %v325, 1.0
    %v342 = vadd.f32 %v326, 1.0
    %v343 = vadd.f32 %v327, 1.0
    %v344 = vadd.f32 %v328, 1.0
    %v345 = vadd.f32 %v329, 1.0
    %v346 = vadd.f32 %v330, 1.0
    %v347 = vadd.f32 %v331, 1.0
    %v348 = vadd.f32 %v332, 1.0
    %v349 = vadd.f32 %v333, 1.0
    %v350 = vadd.f32 %v334, 1.0
    %v351 = vadd.f32 %v335, 1.0
    %v352 = vadd.f32 %v336, 1.0
    %v353 = vadd.f32 %v337, 1.0
    %v354 = vmul.f32 %v226, %v338
    %v355 = vmul.f32 %v227, %v339
    %v356 = vmul.f32 %v228, %v340
    %v357 = vmul.f32 %v229, %v341
    %v358 = vmul.f32 %v230, %v342
    %v359 = vmul.f32 %v231, %v343
    %v360 = vmul.f32 %v232, %v344
    %v361 = vmul.f32 %v233, %v345
    %v362 = vmul.f32 %v234, %v346
    %v363 = vmul.f32 %v235, %v347
    %v364 = vmul.f32 %v236, %v348
    %v365 = vmul.f32 %v237, %v349
    %v366 = vmul.f32 %v238, %v350
    %v367 = vmul.f32 %v239, %v351
    %v368 = vmul.f32 %v240, %v352
    %v369 = vmul.f32 %v241, %v353
    %v370 = vpack.c.bf16 %v355, %v354
    %v371 = vpack.c.bf16 %v357, %v356
    %v372 = vpack.c.bf16 %v359, %v358
    %v373 = vpack.c.bf16 %v361, %v360
    %v374 = vpack.c.bf16 %v363, %v362
    %v375 = vpack.c.bf16 %v365, %v364
    %v376 = vpack.c.bf16 %v367, %v366
    %v377 = vpack.c.bf16 %v369, %v368
    %378 = vst.msk [vmem:[#allocation2] sm:$0xff] %vm104, %v370
    %379 = vst.msk [vmem:[#allocation2 + $0x8] sm:$0xff] %vm104, %v371
    %380 = vst.msk [vmem:[#allocation2 + $0x10] sm:$0xff] %vm104, %v372
    %381 = vst.msk [vmem:[#allocation2 + $0x18] sm:$0xff] %vm104, %v373
    %382 = vst.msk [vmem:[#allocation2 + $0x20] sm:$0xff] %vm104, %v374
    %383 = vst.msk [vmem:[#allocation2 + $0x28] sm:$0xff] %vm104, %v375
    %384 = vst.msk [vmem:[#allocation2 + $0x30] sm:$0xff] %vm104, %v376
    %385 = vst.msk [vmem:[#allocation2 + $0x38] sm:$0xff] %vm104, %v377
  $region25: #{tpu_custom_call.1} parent=0 // pred_fallthru
    _
  %v386 = vld [vmem:[#allocation2] sm:$0xff]
  %v387 = vld [vmem:[#allocation2 + $0x8] sm:$0xff]
  %v388 = vld [vmem:[#allocation2 + $0x10] sm:$0xff]
  %v389 = vld [vmem:[#allocation2 + $0x18] sm:$0xff]
  %v390 = vld [vmem:[#allocation2 + $0x20] sm:$0xff]
  %v391 = vld [vmem:[#allocation2 + $0x28] sm:$0xff]
  %v392 = vld [vmem:[#allocation2 + $0x30] sm:$0xff]
  %v393 = vld [vmem:[#allocation2 + $0x38] sm:$0xff]
  %v394 = vld [vmem:[%s3] sm:$0xf]
  %v395 = vld [vmem:[%s3 + $0x4] sm:$0xf]
  %v396 = vld [vmem:[%s3 + $0x8] sm:$0xf]
  %v397 = vld [vmem:[%s3 + $0xc] sm:$0xf]
  %v398 = vld [vmem:[%s4] sm:$0x1]
  %v400 = vlaneseq
  %v401 = vshrl.u32 %v400, 7
  %v402 = vsub.s32 0, %v401
  %v403 = vrot.slane %v398, %v402
  %v409 = vunpack.c.l.b16 %v394
  %v410 = vunpack.c.l.b16 %v395
  %v411 = vunpack.c.l.b16 %v396
  %v412 = vunpack.c.l.b16 %v397
  %v413 = vpack.c.b16 %v410, %v409
  %v414 = vpack.c.b16 %v412, %v411
  %vm417 = vcmask 261120
  %v419 = vsel %vm417, %v386, 0
  %v422 = vsel %vm417, %v387, 0
  %v425 = vsel %vm417, %v388, 0
  %v428 = vsel %vm417, %v389, 0
  %v431 = vsel %vm417, %v390, 0
  %v434 = vsel %vm417, %v391, 0
  %v437 = vsel %vm417, %v392, 0
  %v440 = vsel %vm417, %v393, 0
  %442 = vmatprep.subr.bf16.mxu0 0
  %443 = vmatpush1.bf16.msra.mxu0 %v413
  %444 = vmatprep.subr.bf16.mxu0 0
  %445 = vmatpush1.bf16.msra.mxu0 %v414
  %446 = vmatprep.subr.bf16.mxu0 0
  %447 = vmatpush1.bf16.msra.mxu0 0
  %448 = vmatprep.subr.bf16.mxu0 0
  %449 = vmatpush1.bf16.msra.mxu0 0
  %450 = vmatprep.subr.bf16.mxu0 0
  %451 = vmatpush1.bf16.msra.mxu0 0
  %452 = vmatprep.subr.bf16.mxu0 0
  %453 = vmatpush1.bf16.msra.mxu0 0
  %454 = vmatprep.subr.bf16.mxu0 0
  %455 = vmatpush1.bf16.msra.mxu0 0
  %456 = vmatprep.subr.bf16.mxu0 0
  %457 = vmatpush1.bf16.msra.mxu0 0
  %458 = vmatprep.subr.bf16.mxu0 0
  %459 = vmatpush1.bf16.msra.mxu0 0
  %460 = vmatprep.subr.bf16.mxu0 0
  %461 = vmatpush1.bf16.msra.mxu0 0
  %462 = vmatprep.subr.bf16.mxu0 0
  %463 = vmatpush1.bf16.msra.mxu0 0
  %464 = vmatprep.subr.bf16.mxu0 0
  %465 = vmatpush1.bf16.msra.mxu0 0
  %466 = vmatprep.subr.bf16.mxu0 0
  %467 = vmatpush1.bf16.msra.mxu0 0
  %468 = vmatprep.subr.bf16.mxu0 0
  %469 = vmatpush1.bf16.msra.mxu0 0
  %470 = vmatprep.subr.bf16.mxu0 0
  %471 = vmatpush1.bf16.msra.mxu0 0
  %472 = vmatprep.subr.bf16.mxu0 0
  %473 = vmatpush1.bf16.msra.mxu0 0
  %474 = vmatprep.mubr.bf16.mxu0 0
  %475 = vmatmul.mubr.bf16.gmra.mrb[0].mxu0 %v419
  %v476 = vpop.f32.mrb[0].mxu0
  %v477 = vadd.f32 %v403, %v476
  %v478 = vpop.f32.mrb[0].mxu0
  %v479 = vpop.f32.mrb[0].mxu0
  %v480 = vadd.f32 %v403, %v479
  %v481 = vpop.f32.mrb[0].mxu0
  %482 = vmatprep.mubr.bf16.mxu0 0
  %483 = vmatmul.mubr.bf16.gmra.mrb[0].mxu0 %v422
  %v484 = vpop.f32.mrb[0].mxu0
  %v485 = vadd.f32 %v403, %v484
  %v486 = vpop.f32.mrb[0].mxu0
  %v487 = vpop.f32.mrb[0].mxu0
  %v488 = vadd.f32 %v403, %v487
  %v489 = vpop.f32.mrb[0].mxu0
  %490 = vmatprep.mubr.bf16.mxu0 0
  %491 = vmatmul.mubr.bf16.gmra.mrb[0].mxu0 %v425
  %v492 = vpop.f32.mrb[0].mxu0
  %v493 = vadd.f32 %v403, %v492
  %v494 = vpop.f32.mrb[0].mxu0
  %v495 = vpop.f32.mrb[0].mxu0
  %v496 = vadd.f32 %v403, %v495
  %v497 = vpop.f32.mrb[0].mxu0
  %498 = vmatprep.mubr.bf16.mxu0 0
  %499 = vmatmul.mubr.bf16.gmra.mrb[0].mxu0 %v428
  %v500 = vpop.f32.mrb[0].mxu0
  %v501 = vadd.f32 %v403, %v500
  %v502 = vpop.f32.mrb[0].mxu0
  %v503 = vpop.f32.mrb[0].mxu0
  %v504 = vadd.f32 %v403, %v503
  %v505 = vpop.f32.mrb[0].mxu0
  %506 = vmatprep.mubr.bf16.mxu0 0
  %507 = vmatmul.mubr.bf16.gmra.mrb[0].mxu0 %v431
  %v508 = vpop.f32.mrb[0].mxu0
  %v509 = vadd.f32 %v403, %v508
  %v510 = vpop.f32.mrb[0].mxu0
  %v511 = vpop.f32.mrb[0].mxu0
  %v512 = vadd.f32 %v403, %v511
  %v513 = vpop.f32.mrb[0].mxu0
  %514 = vmatprep.mubr.bf16.mxu0 0
  %515 = vmatmul.mubr.bf16.gmra.mrb[0].mxu0 %v434
  %v516 = vpop.f32.mrb[0].mxu0
  %v517 = vadd.f32 %v403, %v516
  %v518 = vpop.f32.mrb[0].mxu0
  %v519 = vpop.f32.mrb[0].mxu0
  %v520 = vadd.f32 %v403, %v519
  %v521 = vpop.f32.mrb[0].mxu0
  %522 = vmatprep.mubr.bf16.mxu0 0
  %523 = vmatmul.mubr.bf16.gmra.mrb[0].mxu0 %v437
  %v524 = vpop.f32.mrb[0].mxu0
  %v525 = vadd.f32 %v403, %v524
  %v526 = vpop.f32.mrb[0].mxu0
  %v527 = vpop.f32.mrb[0].mxu0
  %v528 = vadd.f32 %v403, %v527
  %v529 = vpop.f32.mrb[0].mxu0
  %530 = vmatprep.mubr.bf16.mxu0 0
  %531 = vmatmul.mubr.bf16.gmra.mrb[0].mxu0 %v440
  %v532 = vpop.f32.mrb[0].mxu0
  %v533 = vadd.f32 %v403, %v532
  %v534 = vpop.f32.mrb[0].mxu0
  %v535 = vpop.f32.mrb[0].mxu0
  %v536 = vadd.f32 %v403, %v535
  %v537 = vpop.f32.mrb[0].mxu0
  %538 = vdwg.mxu0
  %v539 = vpack.c.bf16 %v480, %v477
  %v540 = vpack.c.bf16 %v488, %v485
  %v541 = vpack.c.bf16 %v496, %v493
  %v542 = vpack.c.bf16 %v504, %v501
  %v543 = vpack.c.bf16 %v512, %v509
  %v544 = vpack.c.bf16 %v520, %v517
  %v545 = vpack.c.bf16 %v528, %v525
  %v546 = vpack.c.bf16 %v536, %v533
  %v555 = vunpack.c.l.b16 %v539
  %v556 = vunpack.c.h.b16 %v539
  %v557 = vunpack.c.l.b16 %v540
  %v558 = vunpack.c.h.b16 %v540
  %v559 = vunpack.c.l.b16 %v541
  %v560 = vunpack.c.h.b16 %v541
  %v561 = vunpack.c.l.b16 %v542
  %v562 = vunpack.c.h.b16 %v542
  %v563 = vunpack.c.l.b16 %v543
  %v564 = vunpack.c.h.b16 %v543
  %v565 = vunpack.c.l.b16 %v544
  %v566 = vunpack.c.h.b16 %v544
  %v567 = vunpack.c.l.b16 %v545
  %v568 = vunpack.c.h.b16 %v545
  %v569 = vunpack.c.l.b16 %v546
  %v570 = vunpack.c.h.b16 %v546
  %v571 = vpack.c.b16 %v555, %v555
  %v572 = vpack.c.b16 %v556, %v556
  %v573 = vpack.c.b16 %v557, %v557
  %v574 = vpack.c.b16 %v558, %v558
  %v575 = vpack.c.b16 %v559, %v559
  %v576 = vpack.c.b16 %v560, %v560
  %v577 = vpack.c.b16 %v561, %v561
  %v578 = vpack.c.b16 %v562, %v562
  %v579 = vpack.c.b16 %v563, %v563
  %v580 = vpack.c.b16 %v564, %v564
  %v581 = vpack.c.b16 %v565, %v565
  %v582 = vpack.c.b16 %v566, %v566
  %v583 = vpack.c.b16 %v567, %v567
  %v584 = vpack.c.b16 %v568, %v568
  %v585 = vpack.c.b16 %v569, %v569
  %v586 = vpack.c.b16 %v570, %v570
  %vm603 = vcmask 257024
  %604 = vst.msk [vmem:[%s5] sm:$0xf] %vm603, %v571
  %605 = vst.msk [vmem:[%s5 + $0x4] sm:$0xf] %vm603, %v572
  %606 = vst.msk [vmem:[%s5 + $0x8] sm:$0xf] %vm603, %v573
  %607 = vst.msk [vmem:[%s5 + $0xc] sm:$0xf] %vm603, %v574
  %608 = vst.msk [vmem:[%s5 + $0x10] sm:$0xf] %vm603, %v575
  %609 = vst.msk [vmem:[%s5 + $0x14] sm:$0xf] %vm603, %v576
  %610 = vst.msk [vmem:[%s5 + $0x18] sm:$0xf] %vm603, %v577
  %611 = vst.msk [vmem:[%s5 + $0x1c] sm:$0xf] %vm603, %v578
  %612 = vst.msk [vmem:[%s5 + $0x20] sm:$0xf] %vm603, %v579
  %613 = vst.msk [vmem:[%s5 + $0x24] sm:$0xf] %vm603, %v580
  %614 = vst.msk [vmem:[%s5 + $0x28] sm:$0xf] %vm603, %v581
  %615 = vst.msk [vmem:[%s5 + $0x2c] sm:$0xf] %vm603, %v582
  %616 = vst.msk [vmem:[%s5 + $0x30] sm:$0xf] %vm603, %v583
  %617 = vst.msk [vmem:[%s5 + $0x34] sm:$0xf] %vm603, %v584
  %618 = vst.msk [vmem:[%s5 + $0x38] sm:$0xf] %vm603, %v585
  %619 = vst.msk [vmem:[%s5 + $0x3c] sm:$0xf] %vm603, %v586
  // Predicated region
  $region26: #{tpu_custom_call.1} parent=0 // pred_check
    _
  $region27: #{tpu_custom_call.1} parent=0 // pred_check_branch
    %621 = sbr.rel (0) target = $region29
  $region28: #{tpu_custom_call.1} parent=0 // pred_region
    _
  $region29: #{tpu_custom_call.1} parent=0 // pred_fallthru
    _
  // Predicated region
  $region30: #{tpu_custom_call.1} parent=0 // pred_check
    _
  $region31: #{tpu_custom_call.1} parent=0 // pred_check_branch
    %623 = sbr.rel (0) target = $region33
  $region32: #{tpu_custom_call.1} parent=0 // pred_region
    _
  $region33: #{tpu_custom_call.1} parent=0 // pred_fallthru
    _

</llo_original>
